<compile_context>
chip_gen: v5e
topology: v5e:2x2
jax: 0.10.0
libtpu: 0.0.40
codegen_flags: <defaults>
</compile_context>

<pallas_src>
import functools

import jax
import jax.numpy as jnp
from jax import lax
from jax.experimental import pallas as pl
from jax.experimental.pallas import tpu as pltpu

_NEG_FILL = -1e30   # logit padding value: exp underflows to exactly 0.0
_PACK_W = 128       # lane-dense packed output width for the object kernel


def _round_up(x, m):
    return ((x + m - 1) // m) * m


# ----------------------------- kernels ------------------------------------


def _obj_kernel(logit_ref, out_ref, *, num_classes):
    """Per-object max/argmax over classes >= 1 (background col 0 and padded
    columns excluded). score/pred are packed into a 128-wide f32 tile so all
    stores are lane-dense (no masked vst), and no full softmax is written."""
    logits = logit_ref[...]
    m = jnp.max(logits, axis=-1, keepdims=True)
    e = jnp.exp(logits - m)
    denom = jnp.sum(e, axis=-1, keepdims=True)

    col = lax.broadcasted_iota(jnp.int32, e.shape, 1)
    valid = (col >= 1) & (col < num_classes)
    masked_e = jnp.where(valid, e, -1.0)                 # e >= 0, -1 never wins
    best_e = jnp.max(masked_e, axis=-1, keepdims=True)
    # max softmax prob over classes >= 1 == (max e over classes >= 1) / denom
    score = best_e * pl.reciprocal(denom, approx=False)
    # first-occurrence argmax (matches torch.max over [:, 1:] then +1)
    pred = jnp.min(jnp.where(masked_e == best_e, col, num_classes),
                   axis=-1, keepdims=True)

    ocol = lax.broadcasted_iota(jnp.int32, out_ref.shape, 1)
    out = jnp.where(ocol == 0, score, 0.0)
    out = jnp.where(ocol == 1, pred.astype(jnp.float32), out)
    out_ref[...] = out


def _rel_kernel(idx0_ref, idx1_ref, obj_score_ref, logit_ref, out_ref,
                *, num_classes):
    """Per-relation softmax, max/argmax over classes >= 1, in-kernel gather of
    subject/object scores (one-hot select + lane reduction over a lane-major
    obj-score row), and triple score. The per-row scalars ride along in the
    padded lanes of the softmax output -> single lane-dense output DMA."""
    logits = logit_ref[...]
    m = jnp.max(logits, axis=-1, keepdims=True)
    e = jnp.exp(logits - m)
    denom = jnp.sum(e, axis=-1, keepdims=True)
    inv = pl.reciprocal(denom, approx=False)
    probs = e * inv                                      # padded cols -> 0

    col = lax.broadcasted_iota(jnp.int32, e.shape, 1)
    valid = (col >= 1) & (col < num_classes)
    masked_p = jnp.where(valid, probs, -1.0)             # probs >= 0
    rel_score = jnp.max(masked_p, axis=-1, keepdims=True)
    rel_cls = jnp.min(jnp.where(masked_p == rel_score, col, num_classes),
                      axis=-1, keepdims=True)

    # gather obj_scores[pair] without leaving the kernel
    n_obj_pad = obj_score_ref.shape[1]
    ocol = lax.broadcasted_iota(jnp.int32, (logits.shape[0], n_obj_pad), 1)
    srow = obj_score_ref[...]                            # (1, n_obj_pad)
    s0 = jnp.sum(jnp.where(ocol == idx0_ref[...], srow, 0.0),
                 axis=-1, keepdims=True)
    s1 = jnp.sum(jnp.where(ocol == idx1_ref[...], srow, 0.0),
                 axis=-1, keepdims=True)
    triple = rel_score * s0 * s1

    out = probs
    out = jnp.where(col == num_classes, rel_score, out)
    out = jnp.where(col == num_classes + 1, triple, out)
    out = jnp.where(col == num_classes + 2, rel_cls.astype(jnp.float32), out)
    out_ref[...] = out


# ----------------------------- wrappers ------------------------------------


def _obj_post(obj_logit_p, num_classes, tile_rows):
    n_obj_pad, c_obj_pad = obj_logit_p.shape
    return pl.pallas_call(
        functools.partial(_obj_kernel, num_classes=num_classes),
        grid=(n_obj_pad // tile_rows,),
        in_specs=[pl.BlockSpec((tile_rows, c_obj_pad), lambda i: (i, 0))],
        out_specs=pl.BlockSpec((tile_rows, _PACK_W), lambda i: (i, 0)),
        out_shape=jax.ShapeDtypeStruct((n_obj_pad, _PACK_W), jnp.float32),
        compiler_params=pltpu.CompilerParams(
            dimension_semantics=("parallel",)),
    )(obj_logit_p)


def _rel_post(idx0_p, idx1_p, obj_score_row, rel_logit_p, num_classes, tile_rows):
    n_rel_pad, c_rel_pad = rel_logit_p.shape
    n_obj_pad = obj_score_row.shape[1]
    return pl.pallas_call(
        functools.partial(_rel_kernel, num_classes=num_classes),
        grid=(n_rel_pad // tile_rows,),
        in_specs=[
            pl.BlockSpec((tile_rows, 1), lambda i: (i, 0)),          # subject idx
            pl.BlockSpec((tile_rows, 1), lambda i: (i, 0)),          # object idx
            pl.BlockSpec((1, n_obj_pad), lambda i: (0, 0)),          # obj scores row
            pl.BlockSpec((tile_rows, c_rel_pad), lambda i: (i, 0)),  # rel logits
        ],
        out_specs=pl.BlockSpec((tile_rows, c_rel_pad), lambda i: (i, 0)),
        out_shape=jax.ShapeDtypeStruct((n_rel_pad, c_rel_pad), jnp.float32),
        compiler_params=pltpu.CompilerParams(
            dimension_semantics=("parallel",)),
    )(idx0_p, idx1_p, obj_score_row, rel_logit_p)


def post_processor_forward(rel_logit, obj_logit, rel_pair_idx,
                           *, obj_tile=256, rel_tile=256):
    """Single-image forward of PostProcessor (use_gt_box=True branch)."""
    n_obj, c_obj = obj_logit.shape
    n_rel, c_rel = rel_logit.shape

    # --- pad to TPU-friendly shapes; padding never affects real rows/cols ---
    c_obj_pad = _round_up(c_obj, 128)
    c_rel_pad = _round_up(c_rel + 3, 128)   # +3 packed lanes: score, triple, cls

    tobj = min(obj_tile, _round_up(n_obj, 8))
    n_obj_pad = _round_up(n_obj, tobj)
    tr = min(rel_tile, _round_up(n_rel, 8))
    n_rel_pad = _round_up(n_rel, tr)

    obj_logit_p = jnp.pad(obj_logit.astype(jnp.float32),
                          ((0, n_obj_pad - n_obj), (0, c_obj_pad - c_obj)),
                          constant_values=_NEG_FILL)
    rel_logit_p = jnp.pad(rel_logit.astype(jnp.float32),
                          ((0, n_rel_pad - n_rel), (0, c_rel_pad - c_rel)),
                          constant_values=_NEG_FILL)
    idx0_p = jnp.pad(rel_pair_idx[:, 0:1].astype(jnp.int32),
                     ((0, n_rel_pad - n_rel), (0, 0)))
    idx1_p = jnp.pad(rel_pair_idx[:, 1:2].astype(jnp.int32),
                     ((0, n_rel_pad - n_rel), (0, 0)))

    # --- object head: per-box score / class ---
    obj_comb = _obj_post(obj_logit_p, c_obj, tobj)       # (n_obj_pad, 128)
    obj_scores = obj_comb[:n_obj, 0]
    obj_pred = obj_comb[:n_obj, 1].astype(jnp.int32)
    obj_score_row = obj_comb[:, 0][None, :]              # (1, n_obj_pad) lane-major

    # --- relation head (pair gather fused in-kernel) ---
    rel_comb = _rel_post(idx0_p, idx1_p, obj_score_row, rel_logit_p, c_rel, tr)
    rel_prob = rel_comb[:n_rel, :c_rel]
    triple_scores = rel_comb[:n_rel, c_rel + 1]
    rel_labels = rel_comb[:n_rel, c_rel + 2].astype(jnp.int32)

    # TODO(synk): torch.sort(descending=True) does not guarantee tie ordering;
    # this stable sort of the negated scores may order equal triples differently.
    sorting_idx = jnp.argsort(-triple_scores)

    # TODO(synk): rel_prob[sorting_idx] is a full-matrix HBM gather done in
    # plain JAX; consumers that can index lazily should use sorting_idx+rel_prob.
    return {
        "pred_labels": obj_pred,                       # per-object class (>=1)
        "pred_scores": obj_scores,                     # per-object score
        "rel_pair_idxs": rel_pair_idx[sorting_idx],    # sorted pairs
        "pred_rel_scores": rel_prob[sorting_idx],      # sorted full softmax
        "pred_rel_labels": rel_labels[sorting_idx],    # sorted rel class (>=1)
        "triple_scores_sorted": triple_scores[sorting_idx],
        "sorting_idx": sorting_idx,
    }


# ------------------------------- main --------------------------------------


if __name__ == "__main__":
    key = jax.random.PRNGKey(0)
    k1, k2, k3 = jax.random.split(key, 3)

    N_OBJ, C_OBJ = 8, 32    # objects, object classes (class 0 = background)
    N_REL, C_REL = 16, 51   # relations, relation classes (class 0 = background)

    obj_logit = jax.random.normal(k1, (N_OBJ, C_OBJ), dtype=jnp.float32)
    rel_logit = jax.random.normal(k2, (N_REL, C_REL), dtype=jnp.float32)
    rel_pair_idx = jax.random.randint(k3, (N_REL, 2), 0, N_OBJ, dtype=jnp.int32)

    out = jax.jit(post_processor_forward)(rel_logit, obj_logit, rel_pair_idx)
    out = jax.block_until_ready(out)

    # pure-JAX reference of the same math
    obj_prob_ref = jax.nn.softmax(obj_logit, -1).at[:, 0].set(0.0)
    obj_scores_ref = jnp.max(obj_prob_ref[:, 1:], axis=1)
    obj_pred_ref = (jnp.argmax(obj_prob_ref[:, 1:], axis=1) + 1).astype(jnp.int32)

    rel_prob_ref = jax.nn.softmax(rel_logit, -1)
    rel_scores_ref = jnp.max(rel_prob_ref[:, 1:], axis=1)
    rel_cls_ref = (jnp.argmax(rel_prob_ref[:, 1:], axis=1) + 1).astype(jnp.int32)
    triple_ref = (rel_scores_ref
                  * obj_scores_ref[rel_pair_idx[:, 0]]
                  * obj_scores_ref[rel_pair_idx[:, 1]])

    si = out["sorting_idx"]
    assert jnp.allclose(out["pred_scores"], obj_scores_ref, atol=1e-5)
    assert jnp.array_equal(out["pred_labels"], obj_pred_ref)
    assert jnp.allclose(out["pred_rel_scores"], rel_prob_ref[si], atol=1e-5)
    assert jnp.array_equal(out["pred_rel_labels"], rel_cls_ref[si])
    assert jnp.allclose(out["triple_scores_sorted"], triple_ref[si], atol=1e-5)

    print("KERNEL_OK")
</pallas_src>

<mosaic_0001>
module attributes {stable_mosaic.version = 11 : i64} {
  func.func @_obj_kernel(%arg0: i32, %arg1: memref<8x128xf32, #tpu.memory_space<vmem>>, %arg2: memref<8x128xf32, #tpu.memory_space<vmem>>) attributes {dimension_semantics = [#tpu.dimension_semantics<parallel>], iteration_bounds = array<i64: 1>, scalar_prefetch = 0 : i64, scratch_operands = 0 : i64, tpu.core_type = #tpu.core_type<tc>, window_params = [{transform_indices = @transform_0, window_bounds = array<i64: 8, 128>}, {transform_indices = @transform_1, window_bounds = array<i64: 8, 128>}]} {
    %c0 = arith.constant 0 : index
    %c0_0 = arith.constant 0 : index
    %0 = vector.load %arg1[%c0, %c0_0] : memref<8x128xf32, #tpu.memory_space<vmem>>, vector<8x128xf32>
    %cst = arith.constant dense<0xFF800000> : vector<8xf32>
    %1 = vector.multi_reduction <maximumf>, %0, %cst [1] : vector<8x128xf32> to vector<8xf32>
    %2 = vector.shape_cast %1 : vector<8xf32> to vector<8x1xf32>
    %3 = vector.broadcast %2 : vector<8x1xf32> to vector<8x128xf32>
    %4 = arith.subf %0, %3 : vector<8x128xf32>
    %5 = math.exp %4 : vector<8x128xf32>
    %cst_1 = arith.constant dense<0.000000e+00> : vector<8xf32>
    %6 = vector.multi_reduction <add>, %5, %cst_1 [1] : vector<8x128xf32> to vector<8xf32>
    %7 = vector.shape_cast %6 : vector<8xf32> to vector<8x1xf32>
    %8 = tpu.iota {dimensions = array<i32: 1>} : vector<8x128xi32>
    %c1_i32 = arith.constant 1 : i32
    %9 = vector.broadcast %c1_i32 : i32 to vector<8x128xi32>
    %10 = arith.cmpi sge, %8, %9 : vector<8x128xi32>
    %c32_i32 = arith.constant 32 : i32
    %11 = vector.broadcast %c32_i32 : i32 to vector<8x128xi32>
    %12 = arith.cmpi slt, %8, %11 : vector<8x128xi32>
    %13 = arith.andi %10, %12 : vector<8x128xi1>
    %cst_2 = arith.constant -1.000000e+00 : f32
    %14 = vector.broadcast %cst_2 : f32 to vector<8x128xf32>
    %15 = arith.select %13, %5, %14 : vector<8x128xi1>, vector<8x128xf32>
    %cst_3 = arith.constant dense<0xFF800000> : vector<8xf32>
    %16 = vector.multi_reduction <maximumf>, %15, %cst_3 [1] : vector<8x128xf32> to vector<8xf32>
    %17 = vector.shape_cast %16 : vector<8xf32> to vector<8x1xf32>
    %18 = tpu.reciprocal %7 : vector<8x1xf32> -> vector<8x1xf32>
    %19 = arith.mulf %17, %18 : vector<8x1xf32>
    %20 = vector.broadcast %17 : vector<8x1xf32> to vector<8x128xf32>
    %21 = arith.cmpf oeq, %15, %20 : vector<8x128xf32>
    %c32_i32_4 = arith.constant 32 : i32
    %22 = vector.broadcast %c32_i32_4 : i32 to vector<8x128xi32>
    %23 = arith.select %21, %8, %22 : vector<8x128xi1>, vector<8x128xi32>
    %cst_5 = arith.constant dense<2147483647> : vector<8xi32>
    %24 = vector.multi_reduction <minsi>, %23, %cst_5 [1] : vector<8x128xi32> to vector<8xi32>
    %25 = vector.shape_cast %24 : vector<8xi32> to vector<8x1xi32>
    %26 = tpu.iota {dimensions = array<i32: 1>} : vector<8x128xi32>
    %c0_i32 = arith.constant 0 : i32
    %27 = vector.broadcast %c0_i32 : i32 to vector<8x128xi32>
    %28 = arith.cmpi eq, %26, %27 : vector<8x128xi32>
    %cst_6 = arith.constant 0.000000e+00 : f32
    %29 = vector.shape_cast %19 : vector<8x1xf32> to vector<8x1xf32>
    %30 = vector.broadcast %29 : vector<8x1xf32> to vector<8x128xf32>
    %31 = vector.broadcast %cst_6 : f32 to vector<8x128xf32>
    %32 = arith.select %28, %30, %31 : vector<8x128xi1>, vector<8x128xf32>
    %c1_i32_7 = arith.constant 1 : i32
    %33 = vector.broadcast %c1_i32_7 : i32 to vector<8x128xi32>
    %34 = arith.cmpi eq, %26, %33 : vector<8x128xi32>
    %35 = arith.sitofp %25 : vector<8x1xi32> to vector<8x1xf32>
    %36 = vector.shape_cast %35 : vector<8x1xf32> to vector<8x1xf32>
    %37 = vector.broadcast %36 : vector<8x1xf32> to vector<8x128xf32>
    %38 = arith.select %34, %37, %32 : vector<8x128xi1>, vector<8x128xf32>
    %c0_8 = arith.constant 0 : index
    %c0_9 = arith.constant 0 : index
    %39 = vector.load %arg2[%c0_8, %c0_9] : memref<8x128xf32, #tpu.memory_space<vmem>>, vector<8x128xf32>
    tpu.vector_store %arg2[%c0_8, %c0_9], %38 {strides = array<i32>} : memref<8x128xf32, #tpu.memory_space<vmem>>, vector<8x128xf32>,
    return
  }
  func.func @transform_0(%arg0: i32) -> (i32, i32) {
    %c0_i32 = arith.constant 0 : i32
    %c0_i32_0 = arith.constant 0 : i32
    return %arg0, %c0_i32 : i32, i32
  }
  func.func @transform_1(%arg0: i32) -> (i32, i32) {
    %c0_i32 = arith.constant 0 : i32
    %c0_i32_0 = arith.constant 0 : i32
    return %arg0, %c0_i32 : i32, i32
  }
}

module attributes {stable_mosaic.version = 11 : i64} {
  func.func @_rel_kernel(%arg0: i32, %arg1: memref<16x1xi32, #tpu.memory_space<vmem>>, %arg2: memref<16x1xi32, #tpu.memory_space<vmem>>, %arg3: memref<1x8xf32, #tpu.memory_space<vmem>>, %arg4: memref<16x128xf32, #tpu.memory_space<vmem>>, %arg5: memref<16x128xf32, #tpu.memory_space<vmem>>) attributes {dimension_semantics = [#tpu.dimension_semantics<parallel>], iteration_bounds = array<i64: 1>, scalar_prefetch = 0 : i64, scratch_operands = 0 : i64, tpu.core_type = #tpu.core_type<tc>, window_params = [{transform_indices = @transform_0, window_bounds = array<i64: 16, 1>}, {transform_indices = @transform_1, window_bounds = array<i64: 16, 1>}, {pipeline_mode = #tpu.pipeline_mode<synchronous>, transform_indices = @transform_2, window_bounds = array<i64: 1, 8>}, {transform_indices = @transform_3, window_bounds = array<i64: 16, 128>}, {transform_indices = @transform_4, window_bounds = array<i64: 16, 128>}]} {
    %c0 = arith.constant 0 : index
    %c0_0 = arith.constant 0 : index
    %0 = vector.load %arg4[%c0, %c0_0] : memref<16x128xf32, #tpu.memory_space<vmem>>, vector<16x128xf32>
    %cst = arith.constant dense<0xFF800000> : vector<16xf32>
    %1 = vector.multi_reduction <maximumf>, %0, %cst [1] : vector<16x128xf32> to vector<16xf32>
    %2 = vector.shape_cast %1 : vector<16xf32> to vector<16x1xf32>
    %3 = vector.broadcast %2 : vector<16x1xf32> to vector<16x128xf32>
    %4 = arith.subf %0, %3 : vector<16x128xf32>
    %5 = math.exp %4 : vector<16x128xf32>
    %cst_1 = arith.constant dense<0.000000e+00> : vector<16xf32>
    %6 = vector.multi_reduction <add>, %5, %cst_1 [1] : vector<16x128xf32> to vector<16xf32>
    %7 = vector.shape_cast %6 : vector<16xf32> to vector<16x1xf32>
    %8 = tpu.reciprocal %7 : vector<16x1xf32> -> vector<16x1xf32>
    %9 = vector.broadcast %8 : vector<16x1xf32> to vector<16x128xf32>
    %10 = arith.mulf %5, %9 : vector<16x128xf32>
    %11 = tpu.iota {dimensions = array<i32: 1>} : vector<16x128xi32>
    %c1_i32 = arith.constant 1 : i32
    %12 = vector.broadcast %c1_i32 : i32 to vector<16x128xi32>
    %13 = arith.cmpi sge, %11, %12 : vector<16x128xi32>
    %c51_i32 = arith.constant 51 : i32
    %14 = vector.broadcast %c51_i32 : i32 to vector<16x128xi32>
    %15 = arith.cmpi slt, %11, %14 : vector<16x128xi32>
    %16 = arith.andi %13, %15 : vector<16x128xi1>
    %cst_2 = arith.constant -1.000000e+00 : f32
    %17 = vector.broadcast %cst_2 : f32 to vector<16x128xf32>
    %18 = arith.select %16, %10, %17 : vector<16x128xi1>, vector<16x128xf32>
    %cst_3 = arith.constant dense<0xFF800000> : vector<16xf32>
    %19 = vector.multi_reduction <maximumf>, %18, %cst_3 [1] : vector<16x128xf32> to vector<16xf32>
    %20 = vector.shape_cast %19 : vector<16xf32> to vector<16x1xf32>
    %21 = vector.broadcast %20 : vector<16x1xf32> to vector<16x128xf32>
    %22 = arith.cmpf oeq, %18, %21 : vector<16x128xf32>
    %c51_i32_4 = arith.constant 51 : i32
    %23 = vector.broadcast %c51_i32_4 : i32 to vector<16x128xi32>
    %24 = arith.select %22, %11, %23 : vector<16x128xi1>, vector<16x128xi32>
    %cst_5 = arith.constant dense<2147483647> : vector<16xi32>
    %25 = vector.multi_reduction <minsi>, %24, %cst_5 [1] : vector<16x128xi32> to vector<16xi32>
    %26 = vector.shape_cast %25 : vector<16xi32> to vector<16x1xi32>
    %27 = tpu.iota {dimensions = array<i32: 1>} : vector<16x8xi32>
    %c0_6 = arith.constant 0 : index
    %c0_7 = arith.constant 0 : index
    %28 = vector.load %arg3[%c0_6, %c0_7] : memref<1x8xf32, #tpu.memory_space<vmem>>, vector<1x8xf32>
    %c0_8 = arith.constant 0 : index
    %c0_9 = arith.constant 0 : index
    %29 = vector.load %arg1[%c0_8, %c0_9] : memref<16x1xi32, #tpu.memory_space<vmem>>, vector<16x1xi32>
    %30 = vector.broadcast %29 : vector<16x1xi32> to vector<16x8xi32>
    %31 = arith.cmpi eq, %27, %30 : vector<16x8xi32>
    %cst_10 = arith.constant 0.000000e+00 : f32
    %32 = vector.shape_cast %28 : vector<1x8xf32> to vector<1x8xf32>
    %33 = vector.broadcast %32 : vector<1x8xf32> to vector<16x8xf32>
    %34 = vector.broadcast %cst_10 : f32 to vector<16x8xf32>
    %35 = arith.select %31, %33, %34 : vector<16x8xi1>, vector<16x8xf32>
    %cst_11 = arith.constant dense<0.000000e+00> : vector<16xf32>
    %36 = vector.multi_reduction <add>, %35, %cst_11 [1] : vector<16x8xf32> to vector<16xf32>
    %37 = vector.shape_cast %36 : vector<16xf32> to vector<16x1xf32>
    %c0_12 = arith.constant 0 : index
    %c0_13 = arith.constant 0 : index
    %38 = vector.load %arg2[%c0_12, %c0_13] : memref<16x1xi32, #tpu.memory_space<vmem>>, vector<16x1xi32>
    %39 = vector.broadcast %38 : vector<16x1xi32> to vector<16x8xi32>
    %40 = arith.cmpi eq, %27, %39 : vector<16x8xi32>
    %cst_14 = arith.constant 0.000000e+00 : f32
    %41 = vector.shape_cast %28 : vector<1x8xf32> to vector<1x8xf32>
    %42 = vector.broadcast %41 : vector<1x8xf32> to vector<16x8xf32>
    %43 = vector.broadcast %cst_14 : f32 to vector<16x8xf32>
    %44 = arith.select %40, %42, %43 : vector<16x8xi1>, vector<16x8xf32>
    %cst_15 = arith.constant dense<0.000000e+00> : vector<16xf32>
    %45 = vector.multi_reduction <add>, %44, %cst_15 [1] : vector<16x8xf32> to vector<16xf32>
    %46 = vector.shape_cast %45 : vector<16xf32> to vector<16x1xf32>
    %47 = arith.mulf %20, %37 : vector<16x1xf32>
    %48 = arith.mulf %47, %46 : vector<16x1xf32>
    %c51_i32_16 = arith.constant 51 : i32
    %49 = vector.broadcast %c51_i32_16 : i32 to vector<16x128xi32>
    %50 = arith.cmpi eq, %11, %49 : vector<16x128xi32>
    %51 = vector.shape_cast %20 : vector<16x1xf32> to vector<16x1xf32>
    %52 = vector.broadcast %51 : vector<16x1xf32> to vector<16x128xf32>
    %53 = arith.select %50, %52, %10 : vector<16x128xi1>, vector<16x128xf32>
    %c52_i32 = arith.constant 52 : i32
    %54 = vector.broadcast %c52_i32 : i32 to vector<16x128xi32>
    %55 = arith.cmpi eq, %11, %54 : vector<16x128xi32>
    %56 = vector.shape_cast %48 : vector<16x1xf32> to vector<16x1xf32>
    %57 = vector.broadcast %56 : vector<16x1xf32> to vector<16x128xf32>
    %58 = arith.select %55, %57, %53 : vector<16x128xi1>, vector<16x128xf32>
    %c53_i32 = arith.constant 53 : i32
    %59 = vector.broadcast %c53_i32 : i32 to vector<16x128xi32>
    %60 = arith.cmpi eq, %11, %59 : vector<16x128xi32>
    %61 = arith.sitofp %26 : vector<16x1xi32> to vector<16x1xf32>
    %62 = vector.shape_cast %61 : vector<16x1xf32> to vector<16x1xf32>
    %63 = vector.broadcast %62 : vector<16x1xf32> to vector<16x128xf32>
    %64 = arith.select %60, %63, %58 : vector<16x128xi1>, vector<16x128xf32>
    %c0_17 = arith.constant 0 : index
    %c0_18 = arith.constant 0 : index
    %65 = vector.load %arg5[%c0_17, %c0_18] : memref<16x128xf32, #tpu.memory_space<vmem>>, vector<16x128xf32>
    tpu.vector_store %arg5[%c0_17, %c0_18], %64 {strides = array<i32>} : memref<16x128xf32, #tpu.memory_space<vmem>>, vector<16x128xf32>,
    return
  }
  func.func @transform_0(%arg0: i32) -> (i32, i32) {
    %c0_i32 = arith.constant 0 : i32
    %c0_i32_0 = arith.constant 0 : i32
    return %arg0, %c0_i32 : i32, i32
  }
  func.func @transform_1(%arg0: i32) -> (i32, i32) {
    %c0_i32 = arith.constant 0 : i32
    %c0_i32_0 = arith.constant 0 : i32
    return %arg0, %c0_i32 : i32, i32
  }
  func.func @transform_2(%arg0: i32) -> (i32, i32) {
    %c0_i32 = arith.constant 0 : i32
    %c0_i32_0 = arith.constant 0 : i32
    %c0_i32_1 = arith.constant 0 : i32
    return %c0_i32, %c0_i32_0 : i32, i32
  }
  func.func @transform_3(%arg0: i32) -> (i32, i32) {
    %c0_i32 = arith.constant 0 : i32
    %c0_i32_0 = arith.constant 0 : i32
    return %arg0, %c0_i32 : i32, i32
  }
  func.func @transform_4(%arg0: i32) -> (i32, i32) {
    %c0_i32 = arith.constant 0 : i32
    %c0_i32_0 = arith.constant 0 : i32
    return %arg0, %c0_i32 : i32, i32
  }
}

</mosaic_0001>

<llo_original>
// kernel: neg.1
$region0: #{neg.1}
  #allocation0 [shape = 's32[1]{0}', space=sflag, size = 0x4, scoped, tag = 'scoped memory for neg.1']
  %s0 = inlined_call_operand.vmem [shape: f32[16], index: 0, kind: input, shape index: {}]
  %s1 = inlined_call_operand.vmem [shape: f32[16], index: 1, kind: output, shape index: {}]
  %v2 = vld [vmem:[%s0] sm:$0x1]
  %3 = xla_tuple %v2
  %4 = xla_tuple %3
  %v5 = vxor.u32 %v2, 2147483648
  %6 = xla_tuple %v5
  %7 = vst [vmem:[%s1] sm:$0x1] %v5

// kernel: post_processor_forward.3
$region0: #{post_processor_forward.3}
  #allocation0 [shape = 'u32[]', space=smem, size = 0x4, offset = 0x4, fixed_abs, tag = 'smem constant byte address 0x4 - core index']
  #allocation1 [shape = 'u32[72,128]{1,0:T(1,128)}', space=vmem, size = 0x9000, scoped, tag = 'internal scratch']
  %s0 = inlined_call_operand.vmem [shape: s32[16,1], index: 0, kind: input, shape index: {}]
  %s1 = inlined_call_operand.vmem [shape: s32[16,1], index: 1, kind: input, shape index: {}]
  %s2 = inlined_call_operand.vmem [shape: f32[1,8], index: 2, kind: input, shape index: {}]
  %s3 = inlined_call_operand.vmem [shape: f32[16,128], index: 3, kind: input, shape index: {}]
  %s4 = inlined_call_operand.vmem [shape: f32[16,128], index: 4, kind: output, shape index: {}]
  %s5 = sld [smem:[#allocation0]]
  $region26: #{post_processor_forward.3} parent=0
    _
  %s7 = ssub.s32 1, %s5
  %s8 = scalar_select 0, %s7, %s5
  // Predicated region
  $region2: #{post_processor_forward.3} parent=0 // pred_check
    _
  $region3: #{post_processor_forward.3} parent=0 // pred_check_branch
    %10 = sbr.rel (0) target = $region5
  $region4: #{post_processor_forward.3} parent=0 // pred_region
    _
  $region5: #{post_processor_forward.3} parent=0 // pred_fallthru
    _
  // Predicated region
  $region6: #{post_processor_forward.3} parent=0 // pred_check
    _
  $region7: #{post_processor_forward.3} parent=0 // pred_check_branch
    %12 = sbr.rel (0) target = $region9
  $region8: #{post_processor_forward.3} parent=0 // pred_region
    _
  $region9: #{post_processor_forward.3} parent=0 // pred_fallthru
    _
  // Predicated region
  $region10: #{post_processor_forward.3} parent=0 // pred_check
    _
  $region11: #{post_processor_forward.3} parent=0 // pred_check_branch
    %14 = sbr.rel (0) target = $region13
  $region12: #{post_processor_forward.3} parent=0 // pred_region
    _
  $region13: #{post_processor_forward.3} parent=0 // pred_fallthru
    _
  // Predicated region
  $region14: #{post_processor_forward.3} parent=0 // pred_check
    _
  $region15: #{post_processor_forward.3} parent=0 // pred_check_branch
    %16 = sbr.rel (0) target = $region17
  $region16: #{post_processor_forward.3} parent=0 // pred_region
    _
  $region17: #{post_processor_forward.3} parent=0 // pred_fallthru
    _
  %v17 = vld [vmem:[%s3] sm:$0xff]
  %v18 = vld [vmem:[%s3 + $0x8] sm:$0xff]
  %19 = vmax.xlane.f32.xlu0 %v17
  %v20 = vpop.xlane.xlu0 %19
  %21 = vmax.xlane.f32.xlu0 %v18
  %v22 = vpop.xlane.xlu0 %21
  %v23 = vsub.f32 %v17, %v20
  %v24 = vsub.f32 %v18, %v22
  %v25 = vmul.f32 %v23, 1.442695
  %v26 = vpow.pop %v25
  %v27 = vmul.f32 %v24, 1.442695
  %v28 = vpow.pop %v27
  %29 = vadd.xlane.f32.xlu0 %v26
  %v30 = vpop.xlane.xlu0 %29
  %31 = vadd.xlane.f32.xlu0 %v28
  %v32 = vpop.xlane.xlu0 %31
  %v33 = vrcp.pop %v30
  %v34 = vmul.f32 %v30, %v33
  %v35 = vsub.f32 1.0, %v34
  %v36 = vmul.f32 %v33, %v35
  %v37 = vadd.f32 %v33, %v36
  %vm38 = vweird.f32 %v30
  %vm39 = vweird.f32 %v33
  %vm40 = vmor %vm38, %vm39
  %v41 = vsel %vm40, %v33, %v37
  %v42 = vand.u32 2147483647, %v30
  %vm43 = vcmp.eq.f32.partialorder %v42, 8.507059e+37
  %v44 = vand.u32 %v30, 2147483648
  %v45 = vor.u32 1.1754944e-38, %v44
  %v46 = vsel %vm43, %v45, %v41
  %v47 = vrcp.pop %v32
  %v48 = vmul.f32 %v32, %v47
  %v49 = vsub.f32 1.0, %v48
  %v50 = vmul.f32 %v47, %v49
  %v51 = vadd.f32 %v47, %v50
  %vm52 = vweird.f32 %v32
  %vm53 = vweird.f32 %v47
  %vm54 = vmor %vm52, %vm53
  %v55 = vsel %vm54, %v47, %v51
  %v56 = vand.u32 2147483647, %v32
  %vm57 = vcmp.eq.f32.partialorder %v56, 8.507059e+37
  %v58 = vand.u32 %v32, 2147483648
  %v59 = vor.u32 1.1754944e-38, %v58
  %v60 = vsel %vm57, %v59, %v55
  %v61 = vmul.f32 %v26, %v46
  %v62 = vmul.f32 %v28, %v60
  %v63 = vlaneseq
  %v64 = vand.u32 %v63, 127
  %vm65 = vcmp.ge.s32.totalorder %v64, 1
  %vm66 = vcmp.lt.s32.totalorder %v64, 51
  %vm67 = vmand %vm65, %vm66
  %v68 = vsel %vm67, %v61, -1.0
  %v69 = vsel %vm67, %v62, -1.0
  %70 = vmax.xlane.f32.xlu0 %v68
  %v71 = vpop.xlane.xlu0 %70
  %72 = vmax.xlane.f32.xlu0 %v69
  %v73 = vpop.xlane.xlu0 %72
  %vm74 = vcmp.eq.f32.partialorder %v68, %v71
  %vm75 = vcmp.eq.f32.partialorder %v69, %v73
  %v76 = vsel %vm74, %v64, 51
  %v77 = vsel %vm75, %v64, 51
  %v78 = vand.u32 %v76, 65535
  %v79 = vshra.s32 %v76, 16
  %v80 = vcvt.s32.f32 %v78
  %v81 = vcvt.s32.f32 %v79
  %82 = vmin.xlane.f32.xlu0 %v81
  %v83 = vpop.xlane.xlu0 %82
  %vm84 = vcmp.eq.f32.partialorder %v81, %v83
  %v85 = vsel %vm84, %v80, inf
  %86 = vmin.xlane.f32.xlu0 %v85
  %v87 = vpop.xlane.xlu0 %86
  %v88 = vcvt.f32.s32 %v87
  %v89 = vcvt.f32.s32 %v83
  %v90 = vshll.u32 %v89, 16
  %v91 = vadd.s32 %v90, %v88
  %v92 = vand.u32 %v77, 65535
  %v93 = vshra.s32 %v77, 16
  %v94 = vcvt.s32.f32 %v92
  %v95 = vcvt.s32.f32 %v93
  %96 = vmin.xlane.f32.xlu0 %v95
  %v97 = vpop.xlane.xlu0 %96
  %vm98 = vcmp.eq.f32.partialorder %v95, %v97
  %v99 = vsel %vm98, %v94, inf
  %100 = vmin.xlane.f32.xlu0 %v99
  %v101 = vpop.xlane.xlu0 %100
  %v102 = vcvt.f32.s32 %v101
  %v103 = vcvt.f32.s32 %v97
  %v104 = vshll.u32 %v103, 16
  %v105 = vadd.s32 %v104, %v102
  %v106 = vld [vmem:[%s2] sm:$0x1]
  %v107 = vld [vmem:[%s0] sm:$0xff]
  %v108 = vld [vmem:[%s0 + $0x8] sm:$0xff]
  %109 = vset.pattern.permute.xlu0 0
  %110 = vperm.xlu0 %109, %v107
  %v111 = vpop.permute.xlu0 %110
  %112 = vset.pattern.permute.xlu0 0
  %113 = vperm.xlu0 %112, %v108
  %v114 = vpop.permute.xlu0 %113
  %vm115 = vcmp.eq.s32.totalorder %v64, %v111
  %vm116 = vcmp.eq.s32.totalorder %v64, %v114
  %v118 = vperm.slane %v106, 0
  %v120 = vsel %vm115, %v118, 0.0
  %v121 = vsel %vm116, %v118, 0.0
  %vm122 = vcmask 64512
  %v123 = vsel %vm122, %v120, 0.0
  %124 = vadd.xlane.f32.xlu0 %v123
  %v125 = vpop.xlane.xlu0 %124
  %v126 = vsel %vm122, %v121, 0.0
  %127 = vadd.xlane.f32.xlu0 %v126
  %v128 = vpop.xlane.xlu0 %127
  %v129 = vld [vmem:[%s1] sm:$0xff]
  %v130 = vld [vmem:[%s1 + $0x8] sm:$0xff]
  %131 = vset.pattern.permute.xlu0 0
  %132 = vperm.xlu0 %131, %v129
  %v133 = vpop.permute.xlu0 %132
  %134 = vset.pattern.permute.xlu0 0
  %135 = vperm.xlu0 %134, %v130
  %v136 = vpop.permute.xlu0 %135
  %vm137 = vcmp.eq.s32.totalorder %v64, %v133
  %vm138 = vcmp.eq.s32.totalorder %v64, %v136
  %v139 = vsel %vm137, %v118, 0.0
  %v140 = vsel %vm138, %v118, 0.0
  %v141 = vsel %vm122, %v139, 0.0
  %142 = vadd.xlane.f32.xlu0 %v141
  %v143 = vpop.xlane.xlu0 %142
  %v144 = vsel %vm122, %v140, 0.0
  %145 = vadd.xlane.f32.xlu0 %v144
  %v146 = vpop.xlane.xlu0 %145
  %v147 = vmul.f32 %v71, %v125
  %v148 = vmul.f32 %v73, %v128
  %v149 = vmul.f32 %v147, %v143
  %v150 = vmul.f32 %v148, %v146
  %vm151 = vcmp.eq.s32.totalorder %v64, 51
  %v152 = vsel %vm151, %v71, %v61
  %v153 = vsel %vm151, %v73, %v62
  %vm154 = vcmp.eq.s32.totalorder %v64, 52
  %v155 = vsel %vm154, %v149, %v152
  %v156 = vsel %vm154, %v150, %v153
  %vm157 = vcmp.eq.s32.totalorder %v64, 53
  %v158 = vcvt.s32.f32 %v91
  %v159 = vcvt.s32.f32 %v105
  %v160 = vsel %vm157, %v158, %v155
  %v161 = vsel %vm157, %v159, %v156
  %162 = vst [vmem:[%s4] sm:$0xff] %v160
  %163 = vst [vmem:[%s4 + $0x8] sm:$0xff] %v161
  // Predicated region
  $region18: #{post_processor_forward.3} parent=0 // pred_check
    _
  $region19: #{post_processor_forward.3} parent=0 // pred_check_branch
    %165 = sbr.rel (0) target = $region21
  $region20: #{post_processor_forward.3} parent=0 // pred_region
    _
  $region21: #{post_processor_forward.3} parent=0 // pred_fallthru
    _
  // Predicated region
  $region22: #{post_processor_forward.3} parent=0 // pred_check
    _
  $region23: #{post_processor_forward.3} parent=0 // pred_check_branch
    %167 = sbr.rel (0) target = $region25
  $region24: #{post_processor_forward.3} parent=0 // pred_region
    _
  $region25: #{post_processor_forward.3} parent=0 // pred_fallthru
    _

// kernel: post_processor_forward.2
$region0: #{post_processor_forward.2}
  #allocation0 [shape = 'u32[]', space=smem, size = 0x4, offset = 0x4, fixed_abs, tag = 'smem constant byte address 0x4 - core index']
  #allocation1 [shape = 'u32[72,128]{1,0:T(1,128)}', space=vmem, size = 0x9000, scoped, tag = 'internal scratch']
  %s0 = inlined_call_operand.vmem [shape: f32[8,128], index: 0, kind: input, shape index: {}]
  %s1 = inlined_call_operand.vmem [shape: f32[8,128], index: 1, kind: output, shape index: {}]
  %s2 = sld [smem:[#allocation0]]
  $region14: #{post_processor_forward.2} parent=0
    _
  %s4 = ssub.s32 1, %s2
  %s5 = scalar_select 0, %s4, %s2
  // Predicated region
  $region2: #{post_processor_forward.2} parent=0 // pred_check
    _
  $region3: #{post_processor_forward.2} parent=0 // pred_check_branch
    %7 = sbr.rel (0) target = $region5
  $region4: #{post_processor_forward.2} parent=0 // pred_region
    _
  $region5: #{post_processor_forward.2} parent=0 // pred_fallthru
    _
  %v8 = vld [vmem:[%s0] sm:$0xff]
  %9 = vmax.xlane.f32.xlu0 %v8
  %v10 = vpop.xlane.xlu0 %9
  %v11 = vsub.f32 %v8, %v10
  %v12 = vmul.f32 %v11, 1.442695
  %v13 = vpow.pop %v12
  %14 = vadd.xlane.f32.xlu0 %v13
  %v15 = vpop.xlane.xlu0 %14
  %v16 = vlaneseq
  %v17 = vand.u32 %v16, 127
  %vm18 = vcmp.ge.s32.totalorder %v17, 1
  %vm19 = vcmp.lt.s32.totalorder %v17, 32
  %vm20 = vmand %vm18, %vm19
  %v21 = vsel %vm20, %v13, -1.0
  %22 = vmax.xlane.f32.xlu0 %v21
  %v23 = vpop.xlane.xlu0 %22
  %v24 = vrcp.pop %v15
  %v25 = vmul.f32 %v15, %v24
  %v26 = vsub.f32 1.0, %v25
  %v27 = vmul.f32 %v24, %v26
  %v28 = vadd.f32 %v24, %v27
  %vm29 = vweird.f32 %v15
  %vm30 = vweird.f32 %v24
  %vm31 = vmor %vm29, %vm30
  %v32 = vsel %vm31, %v24, %v28
  %v33 = vand.u32 2147483647, %v15
  %vm34 = vcmp.eq.f32.partialorder %v33, 8.507059e+37
  %v35 = vand.u32 %v15, 2147483648
  %v36 = vor.u32 1.1754944e-38, %v35
  %v37 = vsel %vm34, %v36, %v32
  %v38 = vmul.f32 %v23, %v37
  %vm39 = vcmp.eq.f32.partialorder %v21, %v23
  %v40 = vsel %vm39, %v17, 32
  %v41 = vand.u32 %v40, 65535
  %v42 = vshra.s32 %v40, 16
  %v43 = vcvt.s32.f32 %v41
  %v44 = vcvt.s32.f32 %v42
  %45 = vmin.xlane.f32.xlu0 %v44
  %v46 = vpop.xlane.xlu0 %45
  %vm47 = vcmp.eq.f32.partialorder %v44, %v46
  %v48 = vsel %vm47, %v43, inf
  %49 = vmin.xlane.f32.xlu0 %v48
  %v50 = vpop.xlane.xlu0 %49
  %v51 = vcvt.f32.s32 %v50
  %v52 = vcvt.f32.s32 %v46
  %v53 = vshll.u32 %v52, 16
  %v54 = vadd.s32 %v53, %v51
  %vm55 = vcmp.eq.s32.totalorder %v17, 0
  %v56 = vsel %vm55, %v38, 0.0
  %vm57 = vcmp.eq.s32.totalorder %v17, 1
  %v58 = vcvt.s32.f32 %v54
  %v59 = vsel %vm57, %v58, %v56
  %60 = vst [vmem:[%s1] sm:$0xff] %v59
  // Predicated region
  $region6: #{post_processor_forward.2} parent=0 // pred_check
    _
  $region7: #{post_processor_forward.2} parent=0 // pred_check_branch
    %62 = sbr.rel (0) target = $region9
  $region8: #{post_processor_forward.2} parent=0 // pred_region
    _
  $region9: #{post_processor_forward.2} parent=0 // pred_fallthru
    _
  // Predicated region
  $region10: #{post_processor_forward.2} parent=0 // pred_check
    _
  $region11: #{post_processor_forward.2} parent=0 // pred_check_branch
    %64 = sbr.rel (0) target = $region13
  $region12: #{post_processor_forward.2} parent=0 // pred_region
    _
  $region13: #{post_processor_forward.2} parent=0 // pred_fallthru
    _

</llo_original>
